<compile_context>
chip_gen: v5e
topology: v5e:2x2
jax: 0.10.0
libtpu: 0.0.40
codegen_flags: <defaults>
</compile_context>

<pallas_src>
import math
import functools

import jax
import jax.numpy as jnp
from jax.experimental import pallas as pl
from jax.experimental.pallas import tpu as pltpu


# ----------------------- irreps bookkeeping (glue) -----------------------
def parse_irreps(s):
    """'4x0e+16x1o' -> [(mul, (l, parity)), ...]"""
    out = []
    for term in s.split("+"):
        mul, ir = term.split("x")
        l = int(ir[:-1])
        p = 1 if ir[-1] == "e" else -1
        out.append((int(mul), (l, p)))
    return out


def irreps_dim(irreps):
    return sum(mul * (2 * l + 1) for mul, (l, _) in irreps)


def build_linear_weight(irreps_in, irreps_out, key, dtype=jnp.float32):
    """Builds the dense (din, dout) matrix equivalent to e3nn o3.Linear.

    Internal weights ~ N(0, 1) (as e3nn initializes them), expanded per
    matching irrep pair with kron(w, I_{2l+1}) / sqrt(mul_in).
    Non-matching output irreps stay as zero columns (== output_mask).
    """
    din = irreps_dim(irreps_in)
    dout = irreps_dim(irreps_out)
    w_full = jnp.zeros((din, dout), dtype)

    in_off, off = [], 0
    for mul, (l, _) in irreps_in:
        in_off.append(off)
        off += mul * (2 * l + 1)
    out_off, off = [], 0
    for mul, (l, _) in irreps_out:
        out_off.append(off)
        off += mul * (2 * l + 1)

    weight_numel = 0
    for i_in, (mul_in, ir_in) in enumerate(irreps_in):
        for i_out, (mul_out, ir_out) in enumerate(irreps_out):
            if ir_in != ir_out:
                continue
            key, sub = jax.random.split(key)
            w = jax.random.normal(sub, (mul_in, mul_out), dtype)  # e3nn internal weight
            weight_numel += mul_in * mul_out
            l = ir_in[0]
            d = 2 * l + 1
            block = jnp.kron(w, jnp.eye(d, dtype=dtype)) / math.sqrt(mul_in)
            w_full = w_full.at[
                in_off[i_in] : in_off[i_in] + mul_in * d,
                out_off[i_out] : out_off[i_out] + mul_out * d,
            ].set(block)
    return w_full, weight_numel


# ----------------------------- Pallas kernel -----------------------------
def _linear_kernel(x_ref, w_ref, o_ref):
    # y = x @ W on the MXU, f32 accumulation, cast to output dtype.
    o_ref[...] = jnp.dot(
        x_ref[...], w_ref[...], preferred_element_type=jnp.float32
    ).astype(o_ref.dtype)


def _round_up(v, m):
    return ((v + m - 1) // m) * m


@functools.partial(jax.jit, static_argnames=("tile_n",))
def equivariant_linear(features, w_full, *, tile_n=8192):
    """features: (..., din) -> (..., dout); w_full: folded (din, dout) matrix.

    tile_n must be a multiple of 8 (enforced below) so row blocks satisfy the
    (8, 128) block-shape constraint when the grid has more than one tile.
    """
    *lead, din = features.shape
    dout = w_full.shape[1]

    x = features.reshape(-1, din)
    n = x.shape[0]

    # Row tiling:
    #  * n <= 8: single block of n rows (block == full array dim, legal).
    #  * otherwise: at least 2 tiles (so v7x's second TC gets work via the
    #    "parallel" axis), rows a multiple of 8, capped at tile_n.
    tile_n = max(8, _round_up(tile_n, 8))
    if n <= 8:
        tn = n
    else:
        half = _round_up((n + 1) // 2, 8)
        tn = min(tile_n, half)
    n_tiles = pl.cdiv(n, tn)

    out = pl.pallas_call(
        _linear_kernel,
        out_shape=jax.ShapeDtypeStruct((n, dout), features.dtype),
        grid_spec=pltpu.PrefetchScalarGridSpec(
            num_scalar_prefetch=0,
            grid=(n_tiles,),
            in_specs=[
                pl.BlockSpec((tn, din), lambda i: (i, 0)),
                # Constant index_map -> weight stays resident in VMEM.
                pl.BlockSpec((din, dout), lambda i: (0, 0)),
            ],
            out_specs=pl.BlockSpec((tn, dout), lambda i: (i, 0)),
        ),
        compiler_params=pltpu.CompilerParams(
            dimension_semantics=("parallel",),  # engages v7x's 2nd TC
        ),
        cost_estimate=pl.CostEstimate(
            flops=2 * n * din * dout,
            transcendentals=0,
            bytes_accessed=(n * din + din * dout + n * dout)
            * features.dtype.itemsize,
        ),
    )(x, w_full)

    return out.reshape(*lead, dout)


# --------------------------------- main ----------------------------------
if __name__ == "__main__":
    # Docstring example: Linear("4x0e+16x1o", "8x0e+8x1o")  (160 weights)
    irreps_in = parse_irreps("4x0e+16x1o")    # dim = 4*1 + 16*3 = 52
    irreps_out = parse_irreps("8x0e+8x1o")    # dim = 8*1 + 8*3  = 32

    key = jax.random.PRNGKey(0)
    k_w, k_x, k_x2 = jax.random.split(key, 3)

    # Weight folding happens once, outside the jitted per-call path.
    w_full, weight_numel = build_linear_weight(irreps_in, irreps_out, k_w)
    assert weight_numel == 160  # matches lin.tp.weight_numel in the docstring

    din = irreps_dim(irreps_in)
    dout = irreps_dim(irreps_out)

    # 1) Small leading batch (2, 8) -> n = 16, two 8-row tiles.
    features = jax.random.normal(k_x, (2, 8, din), jnp.float32)
    y = equivariant_linear(features, w_full)
    y = jax.block_until_ready(y)
    y_ref = features @ w_full
    assert y.shape == (2, 8, dout)
    assert jnp.allclose(y, y_ref, atol=1e-5, rtol=1e-5)

    # 2) Multi-tile + ragged last block path (forced small tile_n to exercise it).
    features2 = jax.random.normal(k_x2, (2, 150, din), jnp.float32)  # n = 300
    y2 = equivariant_linear(features2, w_full, tile_n=128)
    y2 = jax.block_until_ready(y2)
    y2_ref = features2 @ w_full
    assert y2.shape == (2, 150, dout)
    assert jnp.allclose(y2, y2_ref, atol=1e-5, rtol=1e-5)

    print("KERNEL_OK")
</pallas_src>

<mosaic_0001>
module attributes {stable_mosaic.version = 11 : i64} {
  func.func @_linear_kernel(%arg0: i32, %arg1: memref<8x52xf32, #tpu.memory_space<vmem>>, %arg2: memref<52x32xf32, #tpu.memory_space<vmem>>, %arg3: memref<8x32xf32, #tpu.memory_space<vmem>>) attributes {dimension_semantics = [#tpu.dimension_semantics<parallel>], iteration_bounds = array<i64: 2>, scalar_prefetch = 0 : i64, scratch_operands = 0 : i64, tpu.core_type = #tpu.core_type<tc>, window_params = [{transform_indices = @transform_0, window_bounds = array<i64: 8, 52>}, {pipeline_mode = #tpu.pipeline_mode<synchronous>, transform_indices = @transform_1, window_bounds = array<i64: 52, 32>}, {transform_indices = @transform_2, window_bounds = array<i64: 8, 32>}]} {
    %c0 = arith.constant 0 : index
    %c0_0 = arith.constant 0 : index
    %0 = vector.load %arg1[%c0, %c0_0] : memref<8x52xf32, #tpu.memory_space<vmem>>, vector<8x52xf32>
    %c0_1 = arith.constant 0 : index
    %c0_2 = arith.constant 0 : index
    %1 = vector.load %arg2[%c0_1, %c0_2] : memref<52x32xf32, #tpu.memory_space<vmem>>, vector<52x32xf32>
    %cst = arith.constant dense<0.000000e+00> : vector<8x32xf32>
    %2 = tpu.matmul %0, %1, %cst {dimension_numbers = #tpu.dot_dimension_numbers<[1], [0], [0], [1], [0, 0, 1, 1], [], []>} : vector<8x52xf32>, vector<52x32xf32>, vector<8x32xf32> -> vector<8x32xf32>
    %c0_3 = arith.constant 0 : index
    %c0_4 = arith.constant 0 : index
    %3 = vector.load %arg3[%c0_3, %c0_4] : memref<8x32xf32, #tpu.memory_space<vmem>>, vector<8x32xf32>
    tpu.vector_store %arg3[%c0_3, %c0_4], %2 {strides = array<i32>} : memref<8x32xf32, #tpu.memory_space<vmem>>, vector<8x32xf32>,
    return
  }
  func.func @transform_0(%arg0: i32) -> (i32, i32) {
    %c0_i32 = arith.constant 0 : i32
    %c0_i32_0 = arith.constant 0 : i32
    return %arg0, %c0_i32 : i32, i32
  }
  func.func @transform_1(%arg0: i32) -> (i32, i32) {
    %c0_i32 = arith.constant 0 : i32
    %c0_i32_0 = arith.constant 0 : i32
    %c0_i32_1 = arith.constant 0 : i32
    return %c0_i32, %c0_i32_0 : i32, i32
  }
  func.func @transform_2(%arg0: i32) -> (i32, i32) {
    %c0_i32 = arith.constant 0 : i32
    %c0_i32_0 = arith.constant 0 : i32
    return %arg0, %c0_i32 : i32, i32
  }
}

</mosaic_0001>

<llo_original>
// kernel: equivariant_linear.1
$region0: #{equivariant_linear.1}
  #allocation0 [shape = 'u32[]', space=smem, size = 0x4, offset = 0x4, fixed_abs, tag = 'smem constant byte address 0x4 - core index']
  #allocation1 [shape = 'u32[72,128]{1,0:T(1,128)}', space=vmem, size = 0x9000, scoped, tag = 'internal scratch']
  %s0 = inlined_call_operand.vmem [shape: f32[16,52], index: 0, kind: input, shape index: {}]
  %s1 = inlined_call_operand.vmem [shape: f32[52,32], index: 1, kind: input, shape index: {}]
  %s2 = inlined_call_operand.hbm [shape: f32[16,32], index: 2, kind: output, shape index: {}]
  %s3 = sld [smem:[#allocation0]]
  $region41: #{equivariant_linear.1} parent=0
    _
  %s5 = ssub.s32 1, %s3
  %s6 = scalar_select 0, %s5, %s3
  $region1: #{equivariant_linear.1} parent=0
    #allocation2 [shape = 'u8[8192]{0}', space=vmem, size = 0x2000, scoped, tag = 'output window, operand 0']
    #allocation3 [shape = 's32[2]{0}', space=sflag, size = 0x8, scoped, tag = 'scoped memory for equivariant_linear.1']
    %7 = vsyncpa [#allocation3], 0
    %s8 = scalar_lea.sflag [#allocation3], 1
    %9 = vsyncpa %s8, 0
    loop: start=0, step=1, limit=4
    $region2: #{equivariant_linear.1} parent=1 // loop_pre_header
      _
    $region3: #{equivariant_linear.1} parent=1 // loop_header
      %s11 = sphi 0, %s15
      %p12 = scmp.ge.s32.totalorder %s11, 4
      %s21 = sphi 0, %s23
      %s24 = sphi 0, %s21
      %s25 = sphi 0, %s24
      %s41 = sphi 0, %s25
      %s45 = sphi 0, %s45
      %s47 = sphi 0, %s45
      %s48 = sphi 0, %s47
      %s62 = sphi 0, %s48
      %s68 = sphi 0, %s70
      %s71 = sphi 0, %s68
      %s72 = sphi 0, %s71
      %s88 = sphi 0, %s72
    $region4: #{equivariant_linear.1} parent=1 // loop_header_branch
      %14 = sbr.rel (%p12) target = $region8
    $region5: #{equivariant_linear.1} parent=1 // loop_body
      %s16 = ssub.s32 %s11, 1
      %s17 = ssub.s32 %s11, 2
      %s18 = sadd.s32 %s11, 1
      %s19 = ssub.s32 %s11, %s18
      %p20 = scmp.eq.s32.totalorder %s19, 0
      %s22 = sadd.s32 %s21, 1
      %s23 = scalar_select %p20, %s21, %s22
      %p26 = pneg %p20
      %p27 = scmp.eq.s32.totalorder %s11, 1
      %p28 = por %p26, %p27
      %p29 = scmp.ne.s32.totalorder %s21, %s24
      %p30 = scmp.eq.s32.totalorder %s11, 0
      %p31 = por %p29, %p30
      %p32 = scmp.ne.s32.totalorder %s21, %s24
      %p33 = scmp.eq.s32.totalorder %s16, 1
      %p34 = por %p32, %p33
      %p35 = scmp.ne.s32.totalorder %s24, %s25
      %p36 = scmp.eq.s32.totalorder %s16, 0
      %p37 = por %p35, %p36
      %p38 = scmp.ne.s32.totalorder %s24, %s25
      %p39 = scmp.eq.s32.totalorder %s17, 1
      %p40 = por %p38, %p39
      %p42 = scmp.ne.s32.totalorder %s25, %s41
      %p43 = scmp.eq.s32.totalorder %s17, 0
      %p44 = por %p42, %p43
      %s46 = sadd.s32 %s45, 1
      %p49 = scmp.eq.s32.totalorder %s11, 1
      %p50 = scmp.ne.s32.totalorder %s45, %s47
      %p51 = scmp.eq.s32.totalorder %s11, 0
      %p52 = por %p50, %p51
      %p53 = scmp.ne.s32.totalorder %s45, %s47
      %p54 = scmp.eq.s32.totalorder %s16, 1
      %p55 = por %p53, %p54
      %p56 = scmp.ne.s32.totalorder %s47, %s48
      %p57 = scmp.eq.s32.totalorder %s16, 0
      %p58 = por %p56, %p57
      %p59 = scmp.ne.s32.totalorder %s47, %s48
      %p60 = scmp.eq.s32.totalorder %s17, 1
      %p61 = por %p59, %p60
      %p63 = scmp.ne.s32.totalorder %s48, %s62
      %p64 = scmp.eq.s32.totalorder %s17, 0
      %p65 = por %p63, %p64
      %s66 = ssub.s32 %s11, %s18
      %p67 = scmp.eq.s32.totalorder %s66, 0
      %s69 = sadd.s32 %s68, 1
      %s70 = scalar_select %p67, %s68, %s69
      %p73 = pneg %p67
      %p74 = scmp.eq.s32.totalorder %s11, 1
      %p75 = por %p73, %p74
      %p76 = scmp.ne.s32.totalorder %s68, %s71
      %p77 = scmp.eq.s32.totalorder %s11, 0
      %p78 = por %p76, %p77
      %p79 = scmp.ne.s32.totalorder %s68, %s71
      %p80 = scmp.eq.s32.totalorder %s16, 1
      %p81 = por %p79, %p80
      %p82 = scmp.ne.s32.totalorder %s71, %s72
      %p83 = scmp.eq.s32.totalorder %s16, 0
      %p84 = por %p82, %p83
      %p85 = scmp.ne.s32.totalorder %s71, %s72
      %p86 = scmp.eq.s32.totalorder %s17, 1
      %p87 = por %p85, %p86
      %p89 = scmp.ne.s32.totalorder %s72, %s88
      %p90 = scmp.eq.s32.totalorder %s17, 0
      %p91 = por %p89, %p90
      %p92 = scmp.le.s32.totalorder 1, %s11
      %p93 = scmp.lt.s32.totalorder %s11, 3
      %p94 = pnand %p92, %p93
      %p95 = pneg %p94
      // Predicated region
      $region9: #{equivariant_linear.1} parent=5 // pred_check
        _
      $region10: #{equivariant_linear.1} parent=5 // pred_check_branch
        %97 = sbr.rel (%p94) target = $region12
      $region11: #{equivariant_linear.1} parent=5 // pred_region
        %s98 = ssub.s32 %s11, 1
        // Predicated region
        $region13: #{equivariant_linear.1} parent=11 // pred_check
          %p99 = pneg %p58
        $region14: #{equivariant_linear.1} parent=11 // pred_check_branch
          %101 = sbr.rel (%p99) target = $region16
        $region15: #{equivariant_linear.1} parent=11 // pred_region
          _
        $region16: #{equivariant_linear.1} parent=11 // pred_fallthru
          _
      $region12: #{equivariant_linear.1} parent=5 // pred_fallthru
        _
      %p102 = scmp.lt.s32.totalorder %s11, 2
      // Predicated region
      $region17: #{equivariant_linear.1} parent=5 // pred_check
        %p103 = pneg %p102
      $region18: #{equivariant_linear.1} parent=5 // pred_check_branch
        %105 = sbr.rel (%p103) target = $region20
      $region19: #{equivariant_linear.1} parent=5 // pred_region
        // Predicated region
        $region21: #{equivariant_linear.1} parent=19 // pred_check
          %p106 = pneg %p31
        $region22: #{equivariant_linear.1} parent=19 // pred_check_branch
          %108 = sbr.rel (%p106) target = $region24
        $region23: #{equivariant_linear.1} parent=19 // pred_region
          %p109 = scmp.lt.s32.totalorder %s11, 1
          %s110 = scalar_select %p109, %s11, 1
          %s111 = smul.addr %s110, 8
          %s112 = scalar_lea.vmem %s0, %s111
        $region24: #{equivariant_linear.1} parent=19 // pred_fallthru
          _
      $region20: #{equivariant_linear.1} parent=5 // pred_fallthru
        _
      %p113 = scmp.le.s32.totalorder 1, %s11
      %p114 = scmp.lt.s32.totalorder %s11, 3
      %p115 = pnand %p113, %p114
      %p116 = pneg %p115
      // Predicated region
      $region25: #{equivariant_linear.1} parent=5 // pred_check
        _
      $region26: #{equivariant_linear.1} parent=5 // pred_check_branch
        %118 = sbr.rel (%p115) target = $region28
      $region27: #{equivariant_linear.1} parent=5 // pred_region
        %s119 = ssub.s32 %s11, 1
        %p120 = scmp.lt.s32.totalorder %s16, 1
        %s121 = scalar_select %p120, %s16, 1
        %s122 = smul.addr %s121, 8
        %s123 = scalar_lea.vmem %s0, %s122
        %p124 = pneg %p37
        %p125 = pneg %p34
        %p126 = pneg %p58
        %p127 = pneg %p55
        %p128 = pneg %p84
        %p129 = pneg %p81
        %s130 = sand.u32 %s71, 1
        %s131 = scalar_lea.sflag [#allocation3], %s130
        %s132 = sand.u32 %s71, 1
        %s133 = smul.addr %s132, 8
        %s134 = scalar_lea.vmem [#allocation2], %s133
        %p135 = scmp.lt.s32.totalorder %s16, 1
        %s136 = scalar_select %p135, %s16, 1
        %s137 = smul.addr %s136, 8
        %s138 = scalar_lea.vmem %s0, %s137
        %v139 = vld [vmem:[%s138] sm:$0xff]
        %v140 = vld [vmem:[%s1] sm:$0xff]
        %v141 = vld [vmem:[%s1 + $0x8] sm:$0xff]
        %v142 = vld [vmem:[%s1 + $0x10] sm:$0xff]
        %v143 = vld [vmem:[%s1 + $0x18] sm:$0xff]
        %v144 = vld [vmem:[%s1 + $0x20] sm:$0xff]
        %v145 = vld [vmem:[%s1 + $0x28] sm:$0xff]
        %v146 = vld [vmem:[%s1 + $0x30] sm:$0xf]
        %vm147 = vcmask 424960
        %v149 = vsel %vm147, %v139, 0
        %vm151 = vcmask 1043456
        %v153 = vsel %vm151, %v146, 0
        %155 = vmatpush.msra.mxu0 0.0
        %156 = vmatpush.msra.mxu0 0.0
        %157 = vmatpush.msra.mxu0 0.0
        %158 = vmatpush.msra.mxu0 0.0
        %159 = vmatpush.msra.mxu0 0.0
        %160 = vmatpush.msra.mxu0 0.0
        %161 = vmatpush.msra.mxu0 0.0
        %162 = vmatpush.msra.mxu0 0.0
        %163 = vmatpush.msra.mxu0 0.0
        %164 = vmatpush.msra.mxu0 %v153
        %165 = vmatpush.msra.mxu0 %v145
        %166 = vmatpush.msra.mxu0 %v144
        %167 = vmatpush.msra.mxu0 %v143
        %168 = vmatpush.msra.mxu0 %v142
        %169 = vmatpush.msra.mxu0 %v141
        %170 = vmatpush.msra.mxu0 %v140
        %171 = vmatmul.f32.gmra.mxu0 %v149
        %v172 = vpop.f32.mrf.mxu0
        %v173 = vadd.f32 0.0, %v172
        %174 = vdwg.mxu0
        %vm175 = vcmask 261120
        %176 = vst.msk [vmem:[%s134] sm:$0xff] %vm175, %v173
        %s177 = sand.u32 %s71, 1
        %s178 = scalar_lea.sflag [#allocation3], %s177
        %s179 = sand.u32 %s71, 1
        %s180 = smul.addr %s179, 8
        %s181 = scalar_lea.vmem [#allocation2], %s180
        // Predicated region
        $region29: #{equivariant_linear.1} parent=27 // pred_check
          %p182 = pneg %p81
        $region30: #{equivariant_linear.1} parent=27 // pred_check_branch
          %184 = sbr.rel (%p182) target = $region32
        $region31: #{equivariant_linear.1} parent=27 // pred_region
          %186 = vsyncadd %s178, 0
          %s187 = smul.addr %s16, 8
          %s188 = scalar_lea.hbm %s2, %s187
          %s190 = sshll.u32 %s181, 4
          %s191 = int_to_ptr.vmem [resolvable:$true] %s190
          %s192 = sshll.u32 %s188, 4
          %s193 = int_to_ptr.hbm [resolvable:$true] %s192
          %195 = dma.vmem_to_hbm [thread:$0]  %s191, 128, %s193, %s178
        $region32: #{equivariant_linear.1} parent=27 // pred_fallthru
          _
      $region28: #{equivariant_linear.1} parent=5 // pred_fallthru
        _
      %p196 = scmp.le.s32.totalorder 2, %s11
      // Predicated region
      $region33: #{equivariant_linear.1} parent=5 // pred_check
        %p197 = pneg %p196
      $region34: #{equivariant_linear.1} parent=5 // pred_check_branch
        %199 = sbr.rel (%p197) target = $region36
      $region35: #{equivariant_linear.1} parent=5 // pred_region
        %s200 = ssub.s32 %s11, 2
        // Predicated region
        $region37: #{equivariant_linear.1} parent=35 // pred_check
          %p201 = pneg %p87
        $region38: #{equivariant_linear.1} parent=35 // pred_check_branch
          %203 = sbr.rel (%p201) target = $region40
        $region39: #{equivariant_linear.1} parent=35 // pred_region
          %s204 = sand.u32 %s72, 1
          %s205 = scalar_lea.sflag [#allocation3], %s204
          %s206 = sand.u32 %s72, 1
          %s207 = smul.addr %s206, 8
          %s208 = scalar_lea.vmem [#allocation2], %s207
          %210 = dma.done %s205, 128
        $region40: #{equivariant_linear.1} parent=35 // pred_fallthru
          _
      $region36: #{equivariant_linear.1} parent=5 // pred_fallthru
        _
    $region6: #{equivariant_linear.1} parent=1 // loop_footer
      %s15 = sadd.s32 1, %s11
    $region7: #{equivariant_linear.1} parent=1 // loop_footer_branch
      %10 = sbr.rel target = $region3
    $region8: #{equivariant_linear.1} parent=1 // loop_exit
      _
    %211 = vsyncpa [#allocation3], 1
    %s212 = scalar_lea.sflag [#allocation3], 1
    %213 = vsyncpa %s212, 1

</llo_original>
